<compile_context>
chip_gen: v7x
topology: tpu7x:2x2x1
jax: 0.10.0
libtpu: 0.0.40
codegen_flags: <defaults>
</compile_context>

<pallas_src>
import numpy as np

import jax
import jax.numpy as jnp
from jax.experimental import pallas as pl
from jax.experimental.pallas import tpu as pltpu


def _column_selectors(W):
    """(3, W, W) 0/1 matrices: P[dx, xin, x] = 1 iff reflect(x - 1 + dx) == xin."""
    Ps = np.zeros((3, W, W), np.float32)
    for dx in range(3):
        for x in range(W):
            j = x - 1 + dx
            if j < 0:
                j = -j
            elif j >= W:
                j = 2 * W - 2 - j
            Ps[dx, j, x] = 1.0
    return Ps


def _band_matrices(w_hwio, W):
    """Fold the dx taps + reflect column padding of a 3x3 conv into band matrices.

    w_hwio: (3, 3, C, C).  Returns B: (3, W*C, W*C) with
      B[dy, xin*C + cin, x*C + co] = sum_dx [reflect(x-1+dx) == xin] * w[dy, dx, cin, co]
    so that  conv_out_row[y] = sum_dy rowpad(in)[y+dy] @ B[dy]  in (W*C)-lane layout.
    """
    C = w_hwio.shape[-1]
    Ps = jnp.asarray(_column_selectors(W), w_hwio.dtype)      # (3, W, W)
    B = jnp.zeros((3, W, C, W, C), w_hwio.dtype)
    for dx in range(3):
        # (1, W, 1, W, 1) * (3, 1, C, 1, C)  -> exact elementwise products, no matmul.
        B = B + Ps[dx][None, :, None, :, None] * w_hwio[:, dx][:, None, :, None, :]
    return B.reshape(3, W * C, W * C)


def _make_resnet_block_kernel(N, H, W, C):
    WC = W * C
    f32 = jnp.float32

    def kernel(xp_ref, b1m_ref, b2m_ref, bias1_ref, bias2_ref, o_ref):
        # xp_ref : (N, H+2, WC)   input, rows reflect-padded, lane-dense
        # b*m_ref: (3, WC, WC)    band matrices (dx taps + column reflect folded in)
        # bias*  : (1, WC)        bias broadcast over (x, c_out) lanes
        # o_ref  : (N, H, WC)

        # ---------- ConvBlock1: conv3x3(reflect) -> bias -> ReLU ----------
        acc1 = [jnp.zeros((H, WC), f32) for _ in range(N)]
        for dy in range(3):
            bm = b1m_ref[dy, :, :]                      # loaded once, used for all images
            for n in range(N):
                acc1[n] = acc1[n] + jnp.dot(
                    xp_ref[n, dy:dy + H, :], bm, preferred_element_type=f32)
        b1v = bias1_ref[...].astype(f32)
        hs = [jnp.maximum(a + b1v, 0.0).astype(b2m_ref.dtype) for a in acc1]

        # ---------- ConvBlock2: conv3x3(reflect) -> bias (no activation) ----------
        # Reflect-pad rows of h as a value (stays in vregs); column padding is
        # already baked into the band matrices.
        hps = [jnp.concatenate([h[1:2, :], h, h[H - 2:H - 1, :]], axis=0)  # (H+2, WC)
               for h in hs]
        acc2 = [jnp.zeros((H, WC), f32) for _ in range(N)]
        for dy in range(3):
            bm = b2m_ref[dy, :, :]
            for n in range(N):
                acc2[n] = acc2[n] + jnp.dot(
                    hps[n][dy:dy + H, :], bm, preferred_element_type=f32)
        b2v = bias2_ref[...].astype(f32)

        # ---------- Residual add (interior rows of row-padded input == x) ----------
        for n in range(N):
            res = xp_ref[n, 1:H + 1, :].astype(f32) + acc2[n] + b2v
            o_ref[n, :, :] = res.astype(o_ref.dtype)

    return kernel


def resnet_block(x_nchw, w1, b1, w2, b2):
    """x_nchw: (N, C, H, W). Weights w*: (3, 3, C, C) HWIO. Biases b*: (C,)."""
    x = jnp.transpose(x_nchw, (0, 2, 3, 1))            # -> NHWC
    N, H, W, C = x.shape
    assert H >= 2 and W >= 2, "reflect padding of 1 requires H, W >= 2"
    WC = W * C

    # Reflect-pad rows only (columns are handled inside the band matrices),
    # then flatten (W, C) into a single lane-dense axis.
    xp = jnp.pad(x, ((0, 0), (1, 1), (0, 0), (0, 0)), mode="reflect")
    xp = xp.reshape(N, H + 2, WC)

    # Weight preprocessing (done once in the wrapper).
    b1m = _band_matrices(w1, W)                         # (3, WC, WC)
    b2m = _band_matrices(w2, W)
    bias1 = jnp.tile(b1, W).reshape(1, WC)              # lane x*C + co -> b[co]
    bias2 = jnp.tile(b2, W).reshape(1, WC)

    kernel = _make_resnet_block_kernel(N, H, W, C)

    out = pl.pallas_call(
        kernel,
        out_shape=jax.ShapeDtypeStruct((N, H, WC), x.dtype),
        grid=(1,),                                       # whole batch in one step
        in_specs=[
            pl.BlockSpec((N, H + 2, WC), lambda i: (0, 0, 0)),
            pl.BlockSpec((3, WC, WC), lambda i: (0, 0, 0)),
            pl.BlockSpec((3, WC, WC), lambda i: (0, 0, 0)),
            pl.BlockSpec((1, WC), lambda i: (0, 0)),
            pl.BlockSpec((1, WC), lambda i: (0, 0)),
        ],
        out_specs=pl.BlockSpec((N, H, WC), lambda i: (0, 0, 0)),
        compiler_params=pltpu.CompilerParams(
            dimension_semantics=("arbitrary",)),
    )(xp, b1m, b2m, bias1, bias2)

    out = out.reshape(N, H, W, C)
    return jnp.transpose(out, (0, 3, 1, 2))              # -> NCHW


def _reference(x_nchw, w1, b1, w2, b2):
    # Pure-JAX reference using lax.conv for correctness checking.
    x = jnp.transpose(x_nchw, (0, 2, 3, 1))

    def conv(z, w, b):
        zp = jnp.pad(z, ((0, 0), (1, 1), (1, 1), (0, 0)), mode="reflect")
        y = jax.lax.conv_general_dilated(
            zp, w, window_strides=(1, 1), padding="VALID",
            dimension_numbers=("NHWC", "HWIO", "NHWC"))
        return y + b

    h = jax.nn.relu(conv(x, w1, b1))
    h = conv(h, w2, b2)
    return jnp.transpose(x + h, (0, 3, 1, 2))


if __name__ == "__main__":
    # Small shapes consistent with the module: dim=8 channels, 16x16 spatial,
    # batch=2 (W*C = 128 -> fully lane-dense layout).
    N, C, H, W = 2, 8, 16, 16
    key = jax.random.PRNGKey(0)
    kx, kw1, kb1, kw2, kb2 = jax.random.split(key, 5)

    x = jax.random.normal(kx, (N, C, H, W), dtype=jnp.float32)

    # Deterministic "Conv2d(dim, dim, 3)"-shaped parameters (HWIO layout),
    # scaled like a Kaiming-uniform fan-in init.
    fan_in = C * 3 * 3
    bound = 1.0 / jnp.sqrt(fan_in)
    w1 = jax.random.uniform(kw1, (3, 3, C, C), jnp.float32, -bound, bound)
    b1 = jax.random.uniform(kb1, (C,), jnp.float32, -bound, bound)
    w2 = jax.random.uniform(kw2, (3, 3, C, C), jnp.float32, -bound, bound)
    b2 = jax.random.uniform(kb2, (C,), jnp.float32, -bound, bound)

    out = resnet_block(x, w1, b1, w2, b2)
    out = jax.block_until_ready(out)

    ref = jax.block_until_ready(_reference(x, w1, b1, w2, b2))
    assert out.shape == (N, C, H, W)
    assert jnp.allclose(out, ref, atol=1e-4, rtol=1e-4), "mismatch vs reference"

    print("KERNEL_OK")
</pallas_src>

<mosaic_0001>
module attributes {stable_mosaic.version = 11 : i64} {
  func.func @kernel(%arg0: i32, %arg1: memref<2x18x128xf32, #tpu.memory_space<vmem>>, %arg2: memref<3x128x128xf32, #tpu.memory_space<vmem>>, %arg3: memref<3x128x128xf32, #tpu.memory_space<vmem>>, %arg4: memref<1x128xf32, #tpu.memory_space<vmem>>, %arg5: memref<1x128xf32, #tpu.memory_space<vmem>>, %arg6: memref<2x16x128xf32, #tpu.memory_space<vmem>>) attributes {dimension_semantics = [#tpu.dimension_semantics<arbitrary>], iteration_bounds = array<i64: 1>, scalar_prefetch = 0 : i64, scratch_operands = 0 : i64, tpu.core_type = #tpu.core_type<tc>, window_params = [{pipeline_mode = #tpu.pipeline_mode<synchronous>, transform_indices = @transform_0, window_bounds = array<i64: 2, 18, 128>}, {pipeline_mode = #tpu.pipeline_mode<synchronous>, transform_indices = @transform_1, window_bounds = array<i64: 3, 128, 128>}, {pipeline_mode = #tpu.pipeline_mode<synchronous>, transform_indices = @transform_2, window_bounds = array<i64: 3, 128, 128>}, {pipeline_mode = #tpu.pipeline_mode<synchronous>, transform_indices = @transform_3, window_bounds = array<i64: 1, 128>}, {pipeline_mode = #tpu.pipeline_mode<synchronous>, transform_indices = @transform_4, window_bounds = array<i64: 1, 128>}, {pipeline_mode = #tpu.pipeline_mode<synchronous>, transform_indices = @transform_5, window_bounds = array<i64: 2, 16, 128>}]} {
    %cst = arith.constant 0.000000e+00 : f32
    %0 = vector.broadcast %cst : f32 to vector<16x128xf32>
    %cst_0 = arith.constant 0.000000e+00 : f32
    %1 = vector.broadcast %cst_0 : f32 to vector<16x128xf32>
    %c0 = arith.constant 0 : index
    %c0_1 = arith.constant 0 : index
    %c0_2 = arith.constant 0 : index
    %2 = vector.load %arg2[%c0, %c0_1, %c0_2] : memref<3x128x128xf32, #tpu.memory_space<vmem>>, vector<1x128x128xf32>
    %3 = vector.shape_cast %2 : vector<1x128x128xf32> to vector<128x128xf32>
    %c0_3 = arith.constant 0 : index
    %c0_4 = arith.constant 0 : index
    %c0_5 = arith.constant 0 : index
    %4 = vector.load %arg1[%c0_3, %c0_4, %c0_5] : memref<2x18x128xf32, #tpu.memory_space<vmem>>, vector<1x16x128xf32>
    %5 = vector.shape_cast %4 : vector<1x16x128xf32> to vector<16x128xf32>
    %cst_6 = arith.constant dense<0.000000e+00> : vector<16x128xf32>
    %6 = tpu.matmul %5, %3, %cst_6 {dimension_numbers = #tpu.dot_dimension_numbers<[1], [0], [0], [1], [0, 0, 1, 1], [], []>} : vector<16x128xf32>, vector<128x128xf32>, vector<16x128xf32> -> vector<16x128xf32>
    %7 = arith.addf %0, %6 : vector<16x128xf32>
    %c1 = arith.constant 1 : index
    %c0_7 = arith.constant 0 : index
    %c0_8 = arith.constant 0 : index
    %8 = vector.load %arg1[%c1, %c0_7, %c0_8] : memref<2x18x128xf32, #tpu.memory_space<vmem>>, vector<1x16x128xf32>
    %9 = vector.shape_cast %8 : vector<1x16x128xf32> to vector<16x128xf32>
    %cst_9 = arith.constant dense<0.000000e+00> : vector<16x128xf32>
    %10 = tpu.matmul %9, %3, %cst_9 {dimension_numbers = #tpu.dot_dimension_numbers<[1], [0], [0], [1], [0, 0, 1, 1], [], []>} : vector<16x128xf32>, vector<128x128xf32>, vector<16x128xf32> -> vector<16x128xf32>
    %11 = arith.addf %1, %10 : vector<16x128xf32>
    %c1_10 = arith.constant 1 : index
    %c0_11 = arith.constant 0 : index
    %c0_12 = arith.constant 0 : index
    %12 = vector.load %arg2[%c1_10, %c0_11, %c0_12] : memref<3x128x128xf32, #tpu.memory_space<vmem>>, vector<1x128x128xf32>
    %13 = vector.shape_cast %12 : vector<1x128x128xf32> to vector<128x128xf32>
    %c0_13 = arith.constant 0 : index
    %c1_14 = arith.constant 1 : index
    %c0_15 = arith.constant 0 : index
    %14 = vector.load %arg1[%c0_13, %c1_14, %c0_15] : memref<2x18x128xf32, #tpu.memory_space<vmem>>, vector<1x16x128xf32>
    %15 = vector.shape_cast %14 : vector<1x16x128xf32> to vector<16x128xf32>
    %cst_16 = arith.constant dense<0.000000e+00> : vector<16x128xf32>
    %16 = tpu.matmul %15, %13, %cst_16 {dimension_numbers = #tpu.dot_dimension_numbers<[1], [0], [0], [1], [0, 0, 1, 1], [], []>} : vector<16x128xf32>, vector<128x128xf32>, vector<16x128xf32> -> vector<16x128xf32>
    %17 = arith.addf %7, %16 : vector<16x128xf32>
    %c1_17 = arith.constant 1 : index
    %c1_18 = arith.constant 1 : index
    %c0_19 = arith.constant 0 : index
    %18 = vector.load %arg1[%c1_17, %c1_18, %c0_19] : memref<2x18x128xf32, #tpu.memory_space<vmem>>, vector<1x16x128xf32>
    %19 = vector.shape_cast %18 : vector<1x16x128xf32> to vector<16x128xf32>
    %cst_20 = arith.constant dense<0.000000e+00> : vector<16x128xf32>
    %20 = tpu.matmul %19, %13, %cst_20 {dimension_numbers = #tpu.dot_dimension_numbers<[1], [0], [0], [1], [0, 0, 1, 1], [], []>} : vector<16x128xf32>, vector<128x128xf32>, vector<16x128xf32> -> vector<16x128xf32>
    %21 = arith.addf %11, %20 : vector<16x128xf32>
    %c2 = arith.constant 2 : index
    %c0_21 = arith.constant 0 : index
    %c0_22 = arith.constant 0 : index
    %22 = vector.load %arg2[%c2, %c0_21, %c0_22] : memref<3x128x128xf32, #tpu.memory_space<vmem>>, vector<1x128x128xf32>
    %23 = vector.shape_cast %22 : vector<1x128x128xf32> to vector<128x128xf32>
    %c0_23 = arith.constant 0 : index
    %c2_24 = arith.constant 2 : index
    %c0_25 = arith.constant 0 : index
    %24 = vector.load %arg1[%c0_23, %c2_24, %c0_25] : memref<2x18x128xf32, #tpu.memory_space<vmem>>, vector<1x16x128xf32>
    %25 = vector.shape_cast %24 : vector<1x16x128xf32> to vector<16x128xf32>
    %cst_26 = arith.constant dense<0.000000e+00> : vector<16x128xf32>
    %26 = tpu.matmul %25, %23, %cst_26 {dimension_numbers = #tpu.dot_dimension_numbers<[1], [0], [0], [1], [0, 0, 1, 1], [], []>} : vector<16x128xf32>, vector<128x128xf32>, vector<16x128xf32> -> vector<16x128xf32>
    %27 = arith.addf %17, %26 : vector<16x128xf32>
    %c1_27 = arith.constant 1 : index
    %c2_28 = arith.constant 2 : index
    %c0_29 = arith.constant 0 : index
    %28 = vector.load %arg1[%c1_27, %c2_28, %c0_29] : memref<2x18x128xf32, #tpu.memory_space<vmem>>, vector<1x16x128xf32>
    %29 = vector.shape_cast %28 : vector<1x16x128xf32> to vector<16x128xf32>
    %cst_30 = arith.constant dense<0.000000e+00> : vector<16x128xf32>
    %30 = tpu.matmul %29, %23, %cst_30 {dimension_numbers = #tpu.dot_dimension_numbers<[1], [0], [0], [1], [0, 0, 1, 1], [], []>} : vector<16x128xf32>, vector<128x128xf32>, vector<16x128xf32> -> vector<16x128xf32>
    %31 = arith.addf %21, %30 : vector<16x128xf32>
    %c0_31 = arith.constant 0 : index
    %c0_32 = arith.constant 0 : index
    %32 = vector.load %arg4[%c0_31, %c0_32] : memref<1x128xf32, #tpu.memory_space<vmem>>, vector<1x128xf32>
    %33 = vector.broadcast %32 : vector<1x128xf32> to vector<16x128xf32>
    %34 = arith.addf %27, %33 : vector<16x128xf32>
    %cst_33 = arith.constant 0.000000e+00 : f32
    %35 = vector.broadcast %cst_33 : f32 to vector<16x128xf32>
    %36 = arith.maximumf %34, %35 : vector<16x128xf32>
    %37 = vector.broadcast %32 : vector<1x128xf32> to vector<16x128xf32>
    %38 = arith.addf %31, %37 : vector<16x128xf32>
    %cst_34 = arith.constant 0.000000e+00 : f32
    %39 = vector.broadcast %cst_34 : f32 to vector<16x128xf32>
    %40 = arith.maximumf %38, %39 : vector<16x128xf32>
    %41 = vector.extract_strided_slice %36 {offsets = [1, 0], sizes = [1, 128], strides = [1, 1]} : vector<16x128xf32> to vector<1x128xf32>
    %42 = vector.extract_strided_slice %36 {offsets = [14, 0], sizes = [1, 128], strides = [1, 1]} : vector<16x128xf32> to vector<1x128xf32>
    %43 = tpu.concatenate %41, %36, %42 in 0 : vector<1x128xf32>, vector<16x128xf32>, vector<1x128xf32> -> vector<18x128xf32>
    %44 = vector.extract_strided_slice %40 {offsets = [1, 0], sizes = [1, 128], strides = [1, 1]} : vector<16x128xf32> to vector<1x128xf32>
    %45 = vector.extract_strided_slice %40 {offsets = [14, 0], sizes = [1, 128], strides = [1, 1]} : vector<16x128xf32> to vector<1x128xf32>
    %46 = tpu.concatenate %44, %40, %45 in 0 : vector<1x128xf32>, vector<16x128xf32>, vector<1x128xf32> -> vector<18x128xf32>
    %cst_35 = arith.constant 0.000000e+00 : f32
    %47 = vector.broadcast %cst_35 : f32 to vector<16x128xf32>
    %cst_36 = arith.constant 0.000000e+00 : f32
    %48 = vector.broadcast %cst_36 : f32 to vector<16x128xf32>
    %c0_37 = arith.constant 0 : index
    %c0_38 = arith.constant 0 : index
    %c0_39 = arith.constant 0 : index
    %49 = vector.load %arg3[%c0_37, %c0_38, %c0_39] : memref<3x128x128xf32, #tpu.memory_space<vmem>>, vector<1x128x128xf32>
    %50 = vector.shape_cast %49 : vector<1x128x128xf32> to vector<128x128xf32>
    %51 = vector.extract_strided_slice %43 {offsets = [0, 0], sizes = [16, 128], strides = [1, 1]} : vector<18x128xf32> to vector<16x128xf32>
    %cst_40 = arith.constant dense<0.000000e+00> : vector<16x128xf32>
    %52 = tpu.matmul %51, %50, %cst_40 {dimension_numbers = #tpu.dot_dimension_numbers<[1], [0], [0], [1], [0, 0, 1, 1], [], []>} : vector<16x128xf32>, vector<128x128xf32>, vector<16x128xf32> -> vector<16x128xf32>
    %53 = arith.addf %47, %52 : vector<16x128xf32>
    %54 = vector.extract_strided_slice %46 {offsets = [0, 0], sizes = [16, 128], strides = [1, 1]} : vector<18x128xf32> to vector<16x128xf32>
    %cst_41 = arith.constant dense<0.000000e+00> : vector<16x128xf32>
    %55 = tpu.matmul %54, %50, %cst_41 {dimension_numbers = #tpu.dot_dimension_numbers<[1], [0], [0], [1], [0, 0, 1, 1], [], []>} : vector<16x128xf32>, vector<128x128xf32>, vector<16x128xf32> -> vector<16x128xf32>
    %56 = arith.addf %48, %55 : vector<16x128xf32>
    %c1_42 = arith.constant 1 : index
    %c0_43 = arith.constant 0 : index
    %c0_44 = arith.constant 0 : index
    %57 = vector.load %arg3[%c1_42, %c0_43, %c0_44] : memref<3x128x128xf32, #tpu.memory_space<vmem>>, vector<1x128x128xf32>
    %58 = vector.shape_cast %57 : vector<1x128x128xf32> to vector<128x128xf32>
    %59 = vector.extract_strided_slice %43 {offsets = [1, 0], sizes = [16, 128], strides = [1, 1]} : vector<18x128xf32> to vector<16x128xf32>
    %cst_45 = arith.constant dense<0.000000e+00> : vector<16x128xf32>
    %60 = tpu.matmul %59, %58, %cst_45 {dimension_numbers = #tpu.dot_dimension_numbers<[1], [0], [0], [1], [0, 0, 1, 1], [], []>} : vector<16x128xf32>, vector<128x128xf32>, vector<16x128xf32> -> vector<16x128xf32>
    %61 = arith.addf %53, %60 : vector<16x128xf32>
    %62 = vector.extract_strided_slice %46 {offsets = [1, 0], sizes = [16, 128], strides = [1, 1]} : vector<18x128xf32> to vector<16x128xf32>
    %cst_46 = arith.constant dense<0.000000e+00> : vector<16x128xf32>
    %63 = tpu.matmul %62, %58, %cst_46 {dimension_numbers = #tpu.dot_dimension_numbers<[1], [0], [0], [1], [0, 0, 1, 1], [], []>} : vector<16x128xf32>, vector<128x128xf32>, vector<16x128xf32> -> vector<16x128xf32>
    %64 = arith.addf %56, %63 : vector<16x128xf32>
    %c2_47 = arith.constant 2 : index
    %c0_48 = arith.constant 0 : index
    %c0_49 = arith.constant 0 : index
    %65 = vector.load %arg3[%c2_47, %c0_48, %c0_49] : memref<3x128x128xf32, #tpu.memory_space<vmem>>, vector<1x128x128xf32>
    %66 = vector.shape_cast %65 : vector<1x128x128xf32> to vector<128x128xf32>
    %67 = vector.extract_strided_slice %43 {offsets = [2, 0], sizes = [16, 128], strides = [1, 1]} : vector<18x128xf32> to vector<16x128xf32>
    %cst_50 = arith.constant dense<0.000000e+00> : vector<16x128xf32>
    %68 = tpu.matmul %67, %66, %cst_50 {dimension_numbers = #tpu.dot_dimension_numbers<[1], [0], [0], [1], [0, 0, 1, 1], [], []>} : vector<16x128xf32>, vector<128x128xf32>, vector<16x128xf32> -> vector<16x128xf32>
    %69 = arith.addf %61, %68 : vector<16x128xf32>
    %70 = vector.extract_strided_slice %46 {offsets = [2, 0], sizes = [16, 128], strides = [1, 1]} : vector<18x128xf32> to vector<16x128xf32>
    %cst_51 = arith.constant dense<0.000000e+00> : vector<16x128xf32>
    %71 = tpu.matmul %70, %66, %cst_51 {dimension_numbers = #tpu.dot_dimension_numbers<[1], [0], [0], [1], [0, 0, 1, 1], [], []>} : vector<16x128xf32>, vector<128x128xf32>, vector<16x128xf32> -> vector<16x128xf32>
    %72 = arith.addf %64, %71 : vector<16x128xf32>
    %c0_52 = arith.constant 0 : index
    %c0_53 = arith.constant 0 : index
    %73 = vector.load %arg5[%c0_52, %c0_53] : memref<1x128xf32, #tpu.memory_space<vmem>>, vector<1x128xf32>
    %c0_54 = arith.constant 0 : index
    %c1_55 = arith.constant 1 : index
    %c0_56 = arith.constant 0 : index
    %74 = vector.load %arg1[%c0_54, %c1_55, %c0_56] : memref<2x18x128xf32, #tpu.memory_space<vmem>>, vector<1x16x128xf32>
    %75 = vector.shape_cast %74 : vector<1x16x128xf32> to vector<16x128xf32>
    %76 = arith.addf %75, %69 : vector<16x128xf32>
    %77 = vector.broadcast %73 : vector<1x128xf32> to vector<16x128xf32>
    %78 = arith.addf %76, %77 : vector<16x128xf32>
    %c0_57 = arith.constant 0 : index
    %c0_58 = arith.constant 0 : index
    %c0_59 = arith.constant 0 : index
    %79 = vector.load %arg6[%c0_57, %c0_58, %c0_59] : memref<2x16x128xf32, #tpu.memory_space<vmem>>, vector<1x16x128xf32>
    %80 = vector.shape_cast %79 : vector<1x16x128xf32> to vector<16x128xf32>
    %81 = vector.shape_cast %78 : vector<16x128xf32> to vector<1x16x128xf32>
    tpu.vector_store %arg6[%c0_57, %c0_58, %c0_59], %81 {strides = array<i32>} : memref<2x16x128xf32, #tpu.memory_space<vmem>>, vector<1x16x128xf32>,
    %c1_60 = arith.constant 1 : index
    %c1_61 = arith.constant 1 : index
    %c0_62 = arith.constant 0 : index
    %82 = vector.load %arg1[%c1_60, %c1_61, %c0_62] : memref<2x18x128xf32, #tpu.memory_space<vmem>>, vector<1x16x128xf32>
    %83 = vector.shape_cast %82 : vector<1x16x128xf32> to vector<16x128xf32>
    %84 = arith.addf %83, %72 : vector<16x128xf32>
    %85 = vector.broadcast %73 : vector<1x128xf32> to vector<16x128xf32>
    %86 = arith.addf %84, %85 : vector<16x128xf32>
    %c1_63 = arith.constant 1 : index
    %c0_64 = arith.constant 0 : index
    %c0_65 = arith.constant 0 : index
    %87 = vector.load %arg6[%c1_63, %c0_64, %c0_65] : memref<2x16x128xf32, #tpu.memory_space<vmem>>, vector<1x16x128xf32>
    %88 = vector.shape_cast %87 : vector<1x16x128xf32> to vector<16x128xf32>
    %89 = vector.shape_cast %86 : vector<16x128xf32> to vector<1x16x128xf32>
    tpu.vector_store %arg6[%c1_63, %c0_64, %c0_65], %89 {strides = array<i32>} : memref<2x16x128xf32, #tpu.memory_space<vmem>>, vector<1x16x128xf32>,
    return
  }
  func.func @transform_0(%arg0: i32) -> (i32, i32, i32) {
    %c0_i32 = arith.constant 0 : i32
    %c0_i32_0 = arith.constant 0 : i32
    %c0_i32_1 = arith.constant 0 : i32
    %c0_i32_2 = arith.constant 0 : i32
    return %c0_i32, %c0_i32_0, %c0_i32_1 : i32, i32, i32
  }
  func.func @transform_1(%arg0: i32) -> (i32, i32, i32) {
    %c0_i32 = arith.constant 0 : i32
    %c0_i32_0 = arith.constant 0 : i32
    %c0_i32_1 = arith.constant 0 : i32
    %c0_i32_2 = arith.constant 0 : i32
    return %c0_i32, %c0_i32_0, %c0_i32_1 : i32, i32, i32
  }
  func.func @transform_2(%arg0: i32) -> (i32, i32, i32) {
    %c0_i32 = arith.constant 0 : i32
    %c0_i32_0 = arith.constant 0 : i32
    %c0_i32_1 = arith.constant 0 : i32
    %c0_i32_2 = arith.constant 0 : i32
    return %c0_i32, %c0_i32_0, %c0_i32_1 : i32, i32, i32
  }
  func.func @transform_3(%arg0: i32) -> (i32, i32) {
    %c0_i32 = arith.constant 0 : i32
    %c0_i32_0 = arith.constant 0 : i32
    %c0_i32_1 = arith.constant 0 : i32
    return %c0_i32, %c0_i32_0 : i32, i32
  }
  func.func @transform_4(%arg0: i32) -> (i32, i32) {
    %c0_i32 = arith.constant 0 : i32
    %c0_i32_0 = arith.constant 0 : i32
    %c0_i32_1 = arith.constant 0 : i32
    return %c0_i32, %c0_i32_0 : i32, i32
  }
  func.func @transform_5(%arg0: i32) -> (i32, i32, i32) {
    %c0_i32 = arith.constant 0 : i32
    %c0_i32_0 = arith.constant 0 : i32
    %c0_i32_1 = arith.constant 0 : i32
    %c0_i32_2 = arith.constant 0 : i32
    return %c0_i32, %c0_i32_0, %c0_i32_1 : i32, i32, i32
  }
}

</mosaic_0001>

<llo_original>
// kernel: tpu_custom_call.1
$region0: #{tpu_custom_call.1}
  #allocation0 [shape = 'u32[]', space=smem, size = 0x4, offset = 0x4, fixed_abs, tag = 'smem constant byte address 0x4 - core index']
  #allocation1 [shape = 'u32[144,128]{1,0:T(1,128)}', space=vmem, size = 0x12000, scoped, tag = 'internal scratch']
  %s0 = inlined_call_operand.vmem [shape: f32[2,18,128], index: 0, kind: input, shape index: {}]
  %s1 = inlined_call_operand.hbm [shape: f32[3,128,128], index: 1, kind: input, shape index: {}]
  %s2 = inlined_call_operand.hbm [shape: f32[3,128,128], index: 2, kind: input, shape index: {}]
  %s3 = inlined_call_operand.vmem [shape: f32[1,128], index: 3, kind: input, shape index: {}]
  %s4 = inlined_call_operand.vmem [shape: f32[1,128], index: 4, kind: input, shape index: {}]
  %s5 = inlined_call_operand.hbm [shape: f32[2,16,128], index: 5, kind: output, shape index: {}]
  %s6 = sld [smem:[#allocation0]]
  $region38: #{tpu_custom_call.1} parent=0
    _
  %s8 = ssub.s32 1, %s6
  %s9 = scalar_select 0, %s8, %s6
  $region1: #{tpu_custom_call.1} parent=0
    #allocation2 [shape = 'u8[196608]{0}', space=vmem, size = 0x30000, scoped, tag = 'input window, operand 1, single buffered']
    #allocation3 [shape = 's32[1]{0}', space=sflag, size = 0x4, scoped, tag = 'scoped memory for tpu_custom_call.1']
    #allocation4 [shape = 's32[1]{0}', space=sflag, size = 0x4, scoped, tag = 'scoped memory for tpu_custom_call.1']
    #allocation5 [shape = 'u8[196608]{0}', space=vmem, size = 0x30000, scoped, tag = 'input window, operand 2, single buffered']
    #allocation6 [shape = 's32[1]{0}', space=sflag, size = 0x4, scoped, tag = 'scoped memory for tpu_custom_call.1']
    #allocation7 [shape = 'u8[16384]{0}', space=vmem, size = 0x4000, scoped, tag = 'output window, operand 0, single buffered']
    %10 = vsyncpa [#allocation3], 0
    %11 = vsyncpa [#allocation6], 0
    %12 = vsyncpa [#allocation4], 0
    // Predicated region
    $region2: #{tpu_custom_call.1} parent=1 // pred_check
      _
    $region3: #{tpu_custom_call.1} parent=1 // pred_check_branch
      %14 = sbr.rel (0) target = $region5
    $region4: #{tpu_custom_call.1} parent=1 // pred_region
      _
    $region5: #{tpu_custom_call.1} parent=1 // pred_fallthru
      _
    // Predicated region
    $region6: #{tpu_custom_call.1} parent=1 // pred_check
      _
    $region7: #{tpu_custom_call.1} parent=1 // pred_check_branch
      %16 = sbr.rel (0) target = $region9
    $region8: #{tpu_custom_call.1} parent=1 // pred_region
      %s18 = ssub.s32 6144, 6144
      %19 = vsyncadd [#allocation3], %s18
      %s20 = sshll.u32 [#allocation2], 4
      %s21 = int_to_ptr.vmem [resolvable:$true] %s20
      %26 = dma.hbm_to_vmem [thread:$0]  %s1, 6144, %s21, [#allocation3], 128, 128, 8
    $region9: #{tpu_custom_call.1} parent=1 // pred_fallthru
      _
    // Predicated region
    $region10: #{tpu_custom_call.1} parent=1 // pred_check
      _
    $region11: #{tpu_custom_call.1} parent=1 // pred_check_branch
      %28 = sbr.rel (0) target = $region13
    $region12: #{tpu_custom_call.1} parent=1 // pred_region
      %s30 = ssub.s32 6144, 6144
      %31 = vsyncadd [#allocation6], %s30
      %s32 = sshll.u32 [#allocation5], 4
      %s33 = int_to_ptr.vmem [resolvable:$true] %s32
      %38 = dma.hbm_to_vmem [thread:$0]  %s2, 6144, %s33, [#allocation6], 128, 128, 8
    $region13: #{tpu_custom_call.1} parent=1 // pred_fallthru
      _
    // Predicated region
    $region14: #{tpu_custom_call.1} parent=1 // pred_check
      _
    $region15: #{tpu_custom_call.1} parent=1 // pred_check_branch
      %40 = sbr.rel (0) target = $region17
    $region16: #{tpu_custom_call.1} parent=1 // pred_region
      _
    $region17: #{tpu_custom_call.1} parent=1 // pred_fallthru
      _
    // Predicated region
    $region18: #{tpu_custom_call.1} parent=1 // pred_check
      _
    $region19: #{tpu_custom_call.1} parent=1 // pred_check_branch
      %42 = sbr.rel (0) target = $region21
    $region20: #{tpu_custom_call.1} parent=1 // pred_region
      _
    $region21: #{tpu_custom_call.1} parent=1 // pred_fallthru
      _
    // Predicated region
    $region22: #{tpu_custom_call.1} parent=1 // pred_check
      _
    $region23: #{tpu_custom_call.1} parent=1 // pred_check_branch
      %44 = sbr.rel (0) target = $region25
    $region24: #{tpu_custom_call.1} parent=1 // pred_region
      %45 = dma.done [#allocation3], 6144
    $region25: #{tpu_custom_call.1} parent=1 // pred_fallthru
      _
    // Predicated region
    $region26: #{tpu_custom_call.1} parent=1 // pred_check
      _
    $region27: #{tpu_custom_call.1} parent=1 // pred_check_branch
      %47 = sbr.rel (0) target = $region29
    $region28: #{tpu_custom_call.1} parent=1 // pred_region
      %48 = dma.done [#allocation6], 6144
    $region29: #{tpu_custom_call.1} parent=1 // pred_fallthru
      _
    %v49 = vld [vmem:[#allocation2] sm:$0xff]
    %v50 = vld [vmem:[#allocation2 + $0x8] sm:$0xff]
    %v51 = vld [vmem:[#allocation2 + $0x10] sm:$0xff]
    %v52 = vld [vmem:[#allocation2 + $0x18] sm:$0xff]
    %v53 = vld [vmem:[#allocation2 + $0x20] sm:$0xff]
    %v54 = vld [vmem:[#allocation2 + $0x28] sm:$0xff]
    %v55 = vld [vmem:[#allocation2 + $0x30] sm:$0xff]
    %v56 = vld [vmem:[#allocation2 + $0x38] sm:$0xff]
    %v57 = vld [vmem:[#allocation2 + $0x40] sm:$0xff]
    %v58 = vld [vmem:[#allocation2 + $0x48] sm:$0xff]
    %v59 = vld [vmem:[#allocation2 + $0x50] sm:$0xff]
    %v60 = vld [vmem:[#allocation2 + $0x58] sm:$0xff]
    %v61 = vld [vmem:[#allocation2 + $0x60] sm:$0xff]
    %v62 = vld [vmem:[#allocation2 + $0x68] sm:$0xff]
    %v63 = vld [vmem:[#allocation2 + $0x70] sm:$0xff]
    %v64 = vld [vmem:[#allocation2 + $0x78] sm:$0xff]
    %v65 = vld [vmem:[%s0] sm:$0xff]
    %v66 = vld [vmem:[%s0 + $0x8] sm:$0xff]
    %s67 = scalar_lea.vmem %s0, 24
    %v68 = vld [vmem:[%s67] sm:$0xff]
    %v69 = vld [vmem:[%s67 + $0x8] sm:$0xff]
    %s70 = scalar_lea.vmem [#allocation2], 128
    %v71 = vld [vmem:[%s70] sm:$0xff]
    %v72 = vld [vmem:[%s70 + $0x8] sm:$0xff]
    %v73 = vld [vmem:[%s70 + $0x10] sm:$0xff]
    %v74 = vld [vmem:[%s70 + $0x18] sm:$0xff]
    %v75 = vld [vmem:[%s70 + $0x20] sm:$0xff]
    %v76 = vld [vmem:[%s70 + $0x28] sm:$0xff]
    %v77 = vld [vmem:[%s70 + $0x30] sm:$0xff]
    %v78 = vld [vmem:[%s70 + $0x38] sm:$0xff]
    %v79 = vld [vmem:[%s70 + $0x40] sm:$0xff]
    %v80 = vld [vmem:[%s70 + $0x48] sm:$0xff]
    %v81 = vld [vmem:[%s70 + $0x50] sm:$0xff]
    %v82 = vld [vmem:[%s70 + $0x58] sm:$0xff]
    %v83 = vld [vmem:[%s70 + $0x60] sm:$0xff]
    %v84 = vld [vmem:[%s70 + $0x68] sm:$0xff]
    %v85 = vld [vmem:[%s70 + $0x70] sm:$0xff]
    %v86 = vld [vmem:[%s70 + $0x78] sm:$0xff]
    %v87 = vld [vmem:[%s0 + $0x1] sm:$0xff]
    %v88 = vld [vmem:[%s0 + $0x9] sm:$0xff]
    %89 = vmatprep.subr.mxu0 0.0
    %90 = vmatpush1.msra.mxu0 %v71
    %91 = vmatprep.subr.mxu0 0.0
    %92 = vmatpush1.msra.mxu0 %v72
    %93 = vmatprep.subr.mxu0 0.0
    %94 = vmatpush1.msra.mxu0 %v73
    %95 = vmatprep.subr.mxu0 0.0
    %96 = vmatpush1.msra.mxu0 %v74
    %97 = vmatprep.subr.mxu0 0.0
    %98 = vmatpush1.msra.mxu0 %v75
    %99 = vmatprep.subr.mxu0 0.0
    %100 = vmatpush1.msra.mxu0 %v76
    %101 = vmatprep.subr.mxu0 0.0
    %102 = vmatpush1.msra.mxu0 %v77
    %103 = vmatprep.subr.mxu0 0.0
    %104 = vmatpush1.msra.mxu0 %v78
    %105 = vmatprep.subr.mxu0 0.0
    %106 = vmatpush1.msra.mxu0 %v79
    %107 = vmatprep.subr.mxu0 0.0
    %108 = vmatpush1.msra.mxu0 %v80
    %109 = vmatprep.subr.mxu0 0.0
    %110 = vmatpush1.msra.mxu0 %v81
    %111 = vmatprep.subr.mxu0 0.0
    %112 = vmatpush1.msra.mxu0 %v82
    %113 = vmatprep.subr.mxu0 0.0
    %114 = vmatpush1.msra.mxu0 %v83
    %115 = vmatprep.subr.mxu0 0.0
    %116 = vmatpush1.msra.mxu0 %v84
    %117 = vmatprep.subr.mxu0 0.0
    %118 = vmatpush1.msra.mxu0 %v85
    %119 = vmatprep.subr.mxu0 0.0
    %120 = vmatpush1.msra.mxu0 %v86
    %121 = vmatprep.subr.mxu0 0.0
    %122 = vmatpush1.msra.mxu0 0.0
    %123 = vmatprep.subr.mxu0 0.0
    %124 = vmatpush1.msra.mxu0 0.0
    %125 = vmatprep.subr.mxu0 0.0
    %126 = vmatpush1.msra.mxu0 0.0
    %127 = vmatprep.subr.mxu0 0.0
    %128 = vmatpush1.msra.mxu0 0.0
    %129 = vmatprep.subr.mxu0 0.0
    %130 = vmatpush1.msra.mxu0 0.0
    %131 = vmatprep.subr.mxu0 0.0
    %132 = vmatpush1.msra.mxu0 0.0
    %133 = vmatprep.subr.mxu0 0.0
    %134 = vmatpush1.msra.mxu0 0.0
    %135 = vmatprep.subr.mxu0 0.0
    %136 = vmatpush1.msra.mxu0 0.0
    %137 = vmatprep.subr.mxu0 0.0
    %138 = vmatpush1.msra.mxu0 0.0
    %139 = vmatprep.subr.mxu0 0.0
    %140 = vmatpush1.msra.mxu0 0.0
    %141 = vmatprep.subr.mxu0 0.0
    %142 = vmatpush1.msra.mxu0 0.0
    %143 = vmatprep.subr.mxu0 0.0
    %144 = vmatpush1.msra.mxu0 0.0
    %145 = vmatprep.subr.mxu0 0.0
    %146 = vmatpush1.msra.mxu0 0.0
    %147 = vmatprep.subr.mxu0 0.0
    %148 = vmatpush1.msra.mxu0 0.0
    %149 = vmatprep.subr.mxu0 0.0
    %150 = vmatpush1.msra.mxu0 0.0
    %151 = vmatprep.subr.mxu0 0.0
    %152 = vmatpush1.msra.mxu0 0.0
    %153 = vmatprep.mubr.f32.mxu0 0.0
    %154 = vmatmul.mubr.f32.gmra.mrb[0].mxu0 %v87
    %v155 = vpop.f32.mrb[0].mxu0
    %v156 = vadd.f32 0.0, %v155
    %v157 = vpop.f32.mrb[0].mxu0
    %158 = vmatprep.mubr.f32.mxu0 0.0
    %159 = vmatmul.mubr.f32.gmra.mrb[0].mxu0 %v88
    %v160 = vpop.f32.mrb[0].mxu0
    %v161 = vadd.f32 0.0, %v160
    %v162 = vpop.f32.mrb[0].mxu0
    %163 = vdwg.mxu0
    %164 = vmatprep.subr.mxu0 0.0
    %165 = vmatpush1.msra.mxu0 %v49
    %166 = vmatprep.subr.mxu0 0.0
    %167 = vmatpush1.msra.mxu0 %v50
    %168 = vmatprep.subr.mxu0 0.0
    %169 = vmatpush1.msra.mxu0 %v51
    %170 = vmatprep.subr.mxu0 0.0
    %171 = vmatpush1.msra.mxu0 %v52
    %172 = vmatprep.subr.mxu0 0.0
    %173 = vmatpush1.msra.mxu0 %v53
    %174 = vmatprep.subr.mxu0 0.0
    %175 = vmatpush1.msra.mxu0 %v54
    %176 = vmatprep.subr.mxu0 0.0
    %177 = vmatpush1.msra.mxu0 %v55
    %178 = vmatprep.subr.mxu0 0.0
    %179 = vmatpush1.msra.mxu0 %v56
    %180 = vmatprep.subr.mxu0 0.0
    %181 = vmatpush1.msra.mxu0 %v57
    %182 = vmatprep.subr.mxu0 0.0
    %183 = vmatpush1.msra.mxu0 %v58
    %184 = vmatprep.subr.mxu0 0.0
    %185 = vmatpush1.msra.mxu0 %v59
    %186 = vmatprep.subr.mxu0 0.0
    %187 = vmatpush1.msra.mxu0 %v60
    %188 = vmatprep.subr.mxu0 0.0
    %189 = vmatpush1.msra.mxu0 %v61
    %190 = vmatprep.subr.mxu0 0.0
    %191 = vmatpush1.msra.mxu0 %v62
    %192 = vmatprep.subr.mxu0 0.0
    %193 = vmatpush1.msra.mxu0 %v63
    %194 = vmatprep.subr.mxu0 0.0
    %195 = vmatpush1.msra.mxu0 %v64
    %196 = vmatprep.subr.mxu0 0.0
    %197 = vmatpush1.msra.mxu0 0.0
    %198 = vmatprep.subr.mxu0 0.0
    %199 = vmatpush1.msra.mxu0 0.0
    %200 = vmatprep.subr.mxu0 0.0
    %201 = vmatpush1.msra.mxu0 0.0
    %202 = vmatprep.subr.mxu0 0.0
    %203 = vmatpush1.msra.mxu0 0.0
    %204 = vmatprep.subr.mxu0 0.0
    %205 = vmatpush1.msra.mxu0 0.0
    %206 = vmatprep.subr.mxu0 0.0
    %207 = vmatpush1.msra.mxu0 0.0
    %208 = vmatprep.subr.mxu0 0.0
    %209 = vmatpush1.msra.mxu0 0.0
    %210 = vmatprep.subr.mxu0 0.0
    %211 = vmatpush1.msra.mxu0 0.0
    %212 = vmatprep.subr.mxu0 0.0
    %213 = vmatpush1.msra.mxu0 0.0
    %214 = vmatprep.subr.mxu0 0.0
    %215 = vmatpush1.msra.mxu0 0.0
    %216 = vmatprep.subr.mxu0 0.0
    %217 = vmatpush1.msra.mxu0 0.0
    %218 = vmatprep.subr.mxu0 0.0
    %219 = vmatpush1.msra.mxu0 0.0
    %220 = vmatprep.subr.mxu0 0.0
    %221 = vmatpush1.msra.mxu0 0.0
    %222 = vmatprep.subr.mxu0 0.0
    %223 = vmatpush1.msra.mxu0 0.0
    %224 = vmatprep.subr.mxu0 0.0
    %225 = vmatpush1.msra.mxu0 0.0
    %226 = vmatprep.subr.mxu0 0.0
    %227 = vmatpush1.msra.mxu0 0.0
    %228 = vmatprep.mubr.f32.mxu0 0.0
    %229 = vmatmul.mubr.f32.gmra.mrb[0].mxu0 %v65
    %v230 = vpop.f32.mrb[0].mxu0
    %v231 = vadd.f32 %v156, %v230
    %v232 = vpop.f32.mrb[0].mxu0
    %233 = vmatprep.mubr.f32.mxu0 0.0
    %234 = vmatmul.mubr.f32.gmra.mrb[0].mxu0 %v66
    %v235 = vpop.f32.mrb[0].mxu0
    %v236 = vadd.f32 %v161, %v235
    %v237 = vpop.f32.mrb[0].mxu0
    %238 = vdwg.mxu0
    %v239 = vld [vmem:[%s67 + $0x1] sm:$0xff]
    %v240 = vld [vmem:[%s67 + $0x9] sm:$0xff]
    %241 = vmatprep.subr.mxu0 0.0
    %242 = vmatpush1.msra.mxu0 %v71
    %243 = vmatprep.subr.mxu0 0.0
    %244 = vmatpush1.msra.mxu0 %v72
    %245 = vmatprep.subr.mxu0 0.0
    %246 = vmatpush1.msra.mxu0 %v73
    %247 = vmatprep.subr.mxu0 0.0
    %248 = vmatpush1.msra.mxu0 %v74
    %249 = vmatprep.subr.mxu0 0.0
    %250 = vmatpush1.msra.mxu0 %v75
    %251 = vmatprep.subr.mxu0 0.0
    %252 = vmatpush1.msra.mxu0 %v76
    %253 = vmatprep.subr.mxu0 0.0
    %254 = vmatpush1.msra.mxu0 %v77
    %255 = vmatprep.subr.mxu0 0.0
    %256 = vmatpush1.msra.mxu0 %v78
    %257 = vmatprep.subr.mxu0 0.0
    %258 = vmatpush1.msra.mxu0 %v79
    %259 = vmatprep.subr.mxu0 0.0
    %260 = vmatpush1.msra.mxu0 %v80
    %261 = vmatprep.subr.mxu0 0.0
    %262 = vmatpush1.msra.mxu0 %v81
    %263 = vmatprep.subr.mxu0 0.0
    %264 = vmatpush1.msra.mxu0 %v82
    %265 = vmatprep.subr.mxu0 0.0
    %266 = vmatpush1.msra.mxu0 %v83
    %267 = vmatprep.subr.mxu0 0.0
    %268 = vmatpush1.msra.mxu0 %v84
    %269 = vmatprep.subr.mxu0 0.0
    %270 = vmatpush1.msra.mxu0 %v85
    %271 = vmatprep.subr.mxu0 0.0
    %272 = vmatpush1.msra.mxu0 %v86
    %273 = vmatprep.subr.mxu0 0.0
    %274 = vmatpush1.msra.mxu0 0.0
    %275 = vmatprep.subr.mxu0 0.0
    %276 = vmatpush1.msra.mxu0 0.0
    %277 = vmatprep.subr.mxu0 0.0
    %278 = vmatpush1.msra.mxu0 0.0
    %279 = vmatprep.subr.mxu0 0.0
    %280 = vmatpush1.msra.mxu0 0.0
    %281 = vmatprep.subr.mxu0 0.0
    %282 = vmatpush1.msra.mxu0 0.0
    %283 = vmatprep.subr.mxu0 0.0
    %284 = vmatpush1.msra.mxu0 0.0
    %285 = vmatprep.subr.mxu0 0.0
    %286 = vmatpush1.msra.mxu0 0.0
    %287 = vmatprep.subr.mxu0 0.0
    %288 = vmatpush1.msra.mxu0 0.0
    %289 = vmatprep.subr.mxu0 0.0
    %290 = vmatpush1.msra.mxu0 0.0
    %291 = vmatprep.subr.mxu0 0.0
    %292 = vmatpush1.msra.mxu0 0.0
    %293 = vmatprep.subr.mxu0 0.0
    %294 = vmatpush1.msra.mxu0 0.0
    %295 = vmatprep.subr.mxu0 0.0
    %296 = vmatpush1.msra.mxu0 0.0
    %297 = vmatprep.subr.mxu0 0.0
    %298 = vmatpush1.msra.mxu0 0.0
    %299 = vmatprep.subr.mxu0 0.0
    %300 = vmatpush1.msra.mxu0 0.0
    %301 = vmatprep.subr.mxu0 0.0
    %302 = vmatpush1.msra.mxu0 0.0
    %303 = vmatprep.subr.mxu0 0.0
    %304 = vmatpush1.msra.mxu0 0.0
    %305 = vmatprep.mubr.f32.mxu0 0.0
    %306 = vmatmul.mubr.f32.gmra.mrb[0].mxu0 %v239
    %v307 = vpop.f32.mrb[0].mxu0
    %v308 = vadd.f32 0.0, %v307
    %v309 = vpop.f32.mrb[0].mxu0
    %310 = vmatprep.mubr.f32.mxu0 0.0
    %311 = vmatmul.mubr.f32.gmra.mrb[0].mxu0 %v240
    %v312 = vpop.f32.mrb[0].mxu0
    %v313 = vadd.f32 0.0, %v312
    %v314 = vpop.f32.mrb[0].mxu0
    %315 = vdwg.mxu0
    %316 = vmatprep.subr.mxu0 0.0
    %317 = vmatpush1.msra.mxu0 %v49
    %318 = vmatprep.subr.mxu0 0.0
    %319 = vmatpush1.msra.mxu0 %v50
    %320 = vmatprep.subr.mxu0 0.0
    %321 = vmatpush1.msra.mxu0 %v51
    %322 = vmatprep.subr.mxu0 0.0
    %323 = vmatpush1.msra.mxu0 %v52
    %324 = vmatprep.subr.mxu0 0.0
    %325 = vmatpush1.msra.mxu0 %v53
    %326 = vmatprep.subr.mxu0 0.0
    %327 = vmatpush1.msra.mxu0 %v54
    %328 = vmatprep.subr.mxu0 0.0
    %329 = vmatpush1.msra.mxu0 %v55
    %330 = vmatprep.subr.mxu0 0.0
    %331 = vmatpush1.msra.mxu0 %v56
    %332 = vmatprep.subr.mxu0 0.0
    %333 = vmatpush1.msra.mxu0 %v57
    %334 = vmatprep.subr.mxu0 0.0
    %335 = vmatpush1.msra.mxu0 %v58
    %336 = vmatprep.subr.mxu0 0.0
    %337 = vmatpush1.msra.mxu0 %v59
    %338 = vmatprep.subr.mxu0 0.0
    %339 = vmatpush1.msra.mxu0 %v60
    %340 = vmatprep.subr.mxu0 0.0
    %341 = vmatpush1.msra.mxu0 %v61
    %342 = vmatprep.subr.mxu0 0.0
    %343 = vmatpush1.msra.mxu0 %v62
    %344 = vmatprep.subr.mxu0 0.0
    %345 = vmatpush1.msra.mxu0 %v63
    %346 = vmatprep.subr.mxu0 0.0
    %347 = vmatpush1.msra.mxu0 %v64
    %348 = vmatprep.subr.mxu0 0.0
    %349 = vmatpush1.msra.mxu0 0.0
    %350 = vmatprep.subr.mxu0 0.0
    %351 = vmatpush1.msra.mxu0 0.0
    %352 = vmatprep.subr.mxu0 0.0
    %353 = vmatpush1.msra.mxu0 0.0
    %354 = vmatprep.subr.mxu0 0.0
    %355 = vmatpush1.msra.mxu0 0.0
    %356 = vmatprep.subr.mxu0 0.0
    %357 = vmatpush1.msra.mxu0 0.0
    %358 = vmatprep.subr.mxu0 0.0
    %359 = vmatpush1.msra.mxu0 0.0
    %360 = vmatprep.subr.mxu0 0.0
    %361 = vmatpush1.msra.mxu0 0.0
    %362 = vmatprep.subr.mxu0 0.0
    %363 = vmatpush1.msra.mxu0 0.0
    %364 = vmatprep.subr.mxu0 0.0
    %365 = vmatpush1.msra.mxu0 0.0
    %366 = vmatprep.subr.mxu0 0.0
    %367 = vmatpush1.msra.mxu0 0.0
    %368 = vmatprep.subr.mxu0 0.0
    %369 = vmatpush1.msra.mxu0 0.0
    %370 = vmatprep.subr.mxu0 0.0
    %371 = vmatpush1.msra.mxu0 0.0
    %372 = vmatprep.subr.mxu0 0.0
    %373 = vmatpush1.msra.mxu0 0.0
    %374 = vmatprep.subr.mxu0 0.0
    %375 = vmatpush1.msra.mxu0 0.0
    %376 = vmatprep.subr.mxu0 0.0
    %377 = vmatpush1.msra.mxu0 0.0
    %378 = vmatprep.subr.mxu0 0.0
    %379 = vmatpush1.msra.mxu0 0.0
    %380 = vmatprep.mubr.f32.mxu0 0.0
    %381 = vmatmul.mubr.f32.gmra.mrb[0].mxu0 %v68
    %v382 = vpop.f32.mrb[0].mxu0
    %v383 = vadd.f32 %v308, %v382
    %v384 = vpop.f32.mrb[0].mxu0
    %385 = vmatprep.mubr.f32.mxu0 0.0
    %386 = vmatmul.mubr.f32.gmra.mrb[0].mxu0 %v69
    %v387 = vpop.f32.mrb[0].mxu0
    %v388 = vadd.f32 %v313, %v387
    %v389 = vpop.f32.mrb[0].mxu0
    %390 = vdwg.mxu0
    %s391 = scalar_lea.vmem [#allocation2], 256
    %v392 = vld [vmem:[%s391] sm:$0xff]
    %v393 = vld [vmem:[%s391 + $0x8] sm:$0xff]
    %v394 = vld [vmem:[%s391 + $0x10] sm:$0xff]
    %v395 = vld [vmem:[%s391 + $0x18] sm:$0xff]
    %v396 = vld [vmem:[%s391 + $0x20] sm:$0xff]
    %v397 = vld [vmem:[%s391 + $0x28] sm:$0xff]
    %v398 = vld [vmem:[%s391 + $0x30] sm:$0xff]
    %v399 = vld [vmem:[%s391 + $0x38] sm:$0xff]
    %v400 = vld [vmem:[%s391 + $0x40] sm:$0xff]
    %v401 = vld [vmem:[%s391 + $0x48] sm:$0xff]
    %v402 = vld [vmem:[%s391 + $0x50] sm:$0xff]
    %v403 = vld [vmem:[%s391 + $0x58] sm:$0xff]
    %v404 = vld [vmem:[%s391 + $0x60] sm:$0xff]
    %v405 = vld [vmem:[%s391 + $0x68] sm:$0xff]
    %v406 = vld [vmem:[%s391 + $0x70] sm:$0xff]
    %v407 = vld [vmem:[%s391 + $0x78] sm:$0xff]
    %v408 = vld [vmem:[%s0 + $0x2] sm:$0xff]
    %v409 = vld [vmem:[%s0 + $0xa] sm:$0xff]
    %410 = vmatprep.subr.mxu0 0.0
    %411 = vmatpush1.msra.mxu0 %v392
    %412 = vmatprep.subr.mxu0 0.0
    %413 = vmatpush1.msra.mxu0 %v393
    %414 = vmatprep.subr.mxu0 0.0
    %415 = vmatpush1.msra.mxu0 %v394
    %416 = vmatprep.subr.mxu0 0.0
    %417 = vmatpush1.msra.mxu0 %v395
    %418 = vmatprep.subr.mxu0 0.0
    %419 = vmatpush1.msra.mxu0 %v396
    %420 = vmatprep.subr.mxu0 0.0
    %421 = vmatpush1.msra.mxu0 %v397
    %422 = vmatprep.subr.mxu0 0.0
    %423 = vmatpush1.msra.mxu0 %v398
    %424 = vmatprep.subr.mxu0 0.0
    %425 = vmatpush1.msra.mxu0 %v399
    %426 = vmatprep.subr.mxu0 0.0
    %427 = vmatpush1.msra.mxu0 %v400
    %428 = vmatprep.subr.mxu0 0.0
    %429 = vmatpush1.msra.mxu0 %v401
    %430 = vmatprep.subr.mxu0 0.0
    %431 = vmatpush1.msra.mxu0 %v402
    %432 = vmatprep.subr.mxu0 0.0
    %433 = vmatpush1.msra.mxu0 %v403
    %434 = vmatprep.subr.mxu0 0.0
    %435 = vmatpush1.msra.mxu0 %v404
    %436 = vmatprep.subr.mxu0 0.0
    %437 = vmatpush1.msra.mxu0 %v405
    %438 = vmatprep.subr.mxu0 0.0
    %439 = vmatpush1.msra.mxu0 %v406
    %440 = vmatprep.subr.mxu0 0.0
    %441 = vmatpush1.msra.mxu0 %v407
    %442 = vmatprep.subr.mxu0 0.0
    %443 = vmatpush1.msra.mxu0 0.0
    %444 = vmatprep.subr.mxu0 0.0
    %445 = vmatpush1.msra.mxu0 0.0
    %446 = vmatprep.subr.mxu0 0.0
    %447 = vmatpush1.msra.mxu0 0.0
    %448 = vmatprep.subr.mxu0 0.0
    %449 = vmatpush1.msra.mxu0 0.0
    %450 = vmatprep.subr.mxu0 0.0
    %451 = vmatpush1.msra.mxu0 0.0
    %452 = vmatprep.subr.mxu0 0.0
    %453 = vmatpush1.msra.mxu0 0.0
    %454 = vmatprep.subr.mxu0 0.0
    %455 = vmatpush1.msra.mxu0 0.0
    %456 = vmatprep.subr.mxu0 0.0
    %457 = vmatpush1.msra.mxu0 0.0
    %458 = vmatprep.subr.mxu0 0.0
    %459 = vmatpush1.msra.mxu0 0.0
    %460 = vmatprep.subr.mxu0 0.0
    %461 = vmatpush1.msra.mxu0 0.0
    %462 = vmatprep.subr.mxu0 0.0
    %463 = vmatpush1.msra.mxu0 0.0
    %464 = vmatprep.subr.mxu0 0.0
    %465 = vmatpush1.msra.mxu0 0.0
    %466 = vmatprep.subr.mxu0 0.0
    %467 = vmatpush1.msra.mxu0 0.0
    %468 = vmatprep.subr.mxu0 0.0
    %469 = vmatpush1.msra.mxu0 0.0
    %470 = vmatprep.subr.mxu0 0.0
    %471 = vmatpush1.msra.mxu0 0.0
    %472 = vmatprep.subr.mxu0 0.0
    %473 = vmatpush1.msra.mxu0 0.0
    %474 = vmatprep.mubr.f32.mxu0 0.0
    %475 = vmatmul.mubr.f32.gmra.mrb[0].mxu0 %v408
    %v476 = vpop.f32.mrb[0].mxu0
    %v477 = vadd.f32 0.0, %v476
    %v478 = vpop.f32.mrb[0].mxu0
    %479 = vmatprep.mubr.f32.mxu0 0.0
    %480 = vmatmul.mubr.f32.gmra.mrb[0].mxu0 %v409
    %v481 = vpop.f32.mrb[0].mxu0
    %v482 = vadd.f32 0.0, %v481
    %v483 = vpop.f32.mrb[0].mxu0
    %484 = vdwg.mxu0
    %v485 = vadd.f32 %v231, %v477
    %v486 = vadd.f32 %v236, %v482
    %v487 = vld [vmem:[%s67 + $0x2] sm:$0xff]
    %v488 = vld [vmem:[%s67 + $0xa] sm:$0xff]
    %489 = vmatprep.subr.mxu0 0.0
    %490 = vmatpush1.msra.mxu0 %v392
    %491 = vmatprep.subr.mxu0 0.0
    %492 = vmatpush1.msra.mxu0 %v393
    %493 = vmatprep.subr.mxu0 0.0
    %494 = vmatpush1.msra.mxu0 %v394
    %495 = vmatprep.subr.mxu0 0.0
    %496 = vmatpush1.msra.mxu0 %v395
    %497 = vmatprep.subr.mxu0 0.0
    %498 = vmatpush1.msra.mxu0 %v396
    %499 = vmatprep.subr.mxu0 0.0
    %500 = vmatpush1.msra.mxu0 %v397
    %501 = vmatprep.subr.mxu0 0.0
    %502 = vmatpush1.msra.mxu0 %v398
    %503 = vmatprep.subr.mxu0 0.0
    %504 = vmatpush1.msra.mxu0 %v399
    %505 = vmatprep.subr.mxu0 0.0
    %506 = vmatpush1.msra.mxu0 %v400
    %507 = vmatprep.subr.mxu0 0.0
    %508 = vmatpush1.msra.mxu0 %v401
    %509 = vmatprep.subr.mxu0 0.0
    %510 = vmatpush1.msra.mxu0 %v402
    %511 = vmatprep.subr.mxu0 0.0
    %512 = vmatpush1.msra.mxu0 %v403
    %513 = vmatprep.subr.mxu0 0.0
    %514 = vmatpush1.msra.mxu0 %v404
    %515 = vmatprep.subr.mxu0 0.0
    %516 = vmatpush1.msra.mxu0 %v405
    %517 = vmatprep.subr.mxu0 0.0
    %518 = vmatpush1.msra.mxu0 %v406
    %519 = vmatprep.subr.mxu0 0.0
    %520 = vmatpush1.msra.mxu0 %v407
    %521 = vmatprep.subr.mxu0 0.0
    %522 = vmatpush1.msra.mxu0 0.0
    %523 = vmatprep.subr.mxu0 0.0
    %524 = vmatpush1.msra.mxu0 0.0
    %525 = vmatprep.subr.mxu0 0.0
    %526 = vmatpush1.msra.mxu0 0.0
    %527 = vmatprep.subr.mxu0 0.0
    %528 = vmatpush1.msra.mxu0 0.0
    %529 = vmatprep.subr.mxu0 0.0
    %530 = vmatpush1.msra.mxu0 0.0
    %531 = vmatprep.subr.mxu0 0.0
    %532 = vmatpush1.msra.mxu0 0.0
    %533 = vmatprep.subr.mxu0 0.0
    %534 = vmatpush1.msra.mxu0 0.0
    %535 = vmatprep.subr.mxu0 0.0
    %536 = vmatpush1.msra.mxu0 0.0
    %537 = vmatprep.subr.mxu0 0.0
    %538 = vmatpush1.msra.mxu0 0.0
    %539 = vmatprep.subr.mxu0 0.0
    %540 = vmatpush1.msra.mxu0 0.0
    %541 = vmatprep.subr.mxu0 0.0
    %542 = vmatpush1.msra.mxu0 0.0
    %543 = vmatprep.subr.mxu0 0.0
    %544 = vmatpush1.msra.mxu0 0.0
    %545 = vmatprep.subr.mxu0 0.0
    %546 = vmatpush1.msra.mxu0 0.0
    %547 = vmatprep.subr.mxu0 0.0
    %548 = vmatpush1.msra.mxu0 0.0
    %549 = vmatprep.subr.mxu0 0.0
    %550 = vmatpush1.msra.mxu0 0.0
    %551 = vmatprep.subr.mxu0 0.0
    %552 = vmatpush1.msra.mxu0 0.0
    %553 = vmatprep.mubr.f32.mxu0 0.0
    %554 = vmatmul.mubr.f32.gmra.mrb[0].mxu0 %v487
    %v555 = vpop.f32.mrb[0].mxu0
    %v556 = vadd.f32 0.0, %v555
    %v557 = vpop.f32.mrb[0].mxu0
    %558 = vmatprep.mubr.f32.mxu0 0.0
    %559 = vmatmul.mubr.f32.gmra.mrb[0].mxu0 %v488
    %v560 = vpop.f32.mrb[0].mxu0
    %v561 = vadd.f32 0.0, %v560
    %v562 = vpop.f32.mrb[0].mxu0
    %563 = vdwg.mxu0
    %v564 = vadd.f32 %v383, %v556
    %v565 = vadd.f32 %v388, %v561
    %v566 = vld [vmem:[%s3] sm:$0x1]
    %v568 = vlaneseq
    %v569 = vshrl.u32 %v568, 7
    %v570 = vsub.s32 0, %v569
    %v571 = vrot.slane %v566, %v570
    %v573 = vadd.f32 %v485, %v571
    %v574 = vadd.f32 %v486, %v571
    %v575 = vmax.f32 %v573, 0.0
    %v576 = vmax.f32 %v574, 0.0
    %v577 = vadd.f32 %v564, %v571
    %v578 = vadd.f32 %v565, %v571
    %v579 = vmax.f32 %v577, 0.0
    %v580 = vmax.f32 %v578, 0.0
    %v582 = vrot.slane %v575, 1
    %vm585 = vcmask 1040384
    %v586 = vrot.slane %v575, 7
    %v587 = vrot.slane %v576, 7
    %v588 = vsel %vm585, %v586, %v587
    %v592 = vrot.slane %v576, 5
    %v594 = vsel %vm585, %v582, %v586
    %v595 = vsel %vm585, %v587, %v592
    %v597 = vrot.slane %v579, 1
    %v600 = vrot.slane %v579, 7
    %v601 = vrot.slane %v580, 7
    %v602 = vsel %vm585, %v600, %v601
    %v606 = vrot.slane %v580, 5
    %v608 = vsel %vm585, %v597, %v600
    %v609 = vsel %vm585, %v601, %v606
    %v610 = vld [vmem:[#allocation5] sm:$0xff]
    %v611 = vld [vmem:[#allocation5 + $0x8] sm:$0xff]
    %v612 = vld [vmem:[#allocation5 + $0x10] sm:$0xff]
    %v613 = vld [vmem:[#allocation5 + $0x18] sm:$0xff]
    %v614 = vld [vmem:[#allocation5 + $0x20] sm:$0xff]
    %v615 = vld [vmem:[#allocation5 + $0x28] sm:$0xff]
    %v616 = vld [vmem:[#allocation5 + $0x30] sm:$0xff]
    %v617 = vld [vmem:[#allocation5 + $0x38] sm:$0xff]
    %v618 = vld [vmem:[#allocation5 + $0x40] sm:$0xff]
    %v619 = vld [vmem:[#allocation5 + $0x48] sm:$0xff]
    %v620 = vld [vmem:[#allocation5 + $0x50] sm:$0xff]
    %v621 = vld [vmem:[#allocation5 + $0x58] sm:$0xff]
    %v622 = vld [vmem:[#allocation5 + $0x60] sm:$0xff]
    %v623 = vld [vmem:[#allocation5 + $0x68] sm:$0xff]
    %v624 = vld [vmem:[#allocation5 + $0x70] sm:$0xff]
    %v625 = vld [vmem:[#allocation5 + $0x78] sm:$0xff]
    %s626 = scalar_lea.vmem [#allocation5], 128
    %v627 = vld [vmem:[%s626] sm:$0xff]
    %v628 = vld [vmem:[%s626 + $0x8] sm:$0xff]
    %v629 = vld [vmem:[%s626 + $0x10] sm:$0xff]
    %v630 = vld [vmem:[%s626 + $0x18] sm:$0xff]
    %v631 = vld [vmem:[%s626 + $0x20] sm:$0xff]
    %v632 = vld [vmem:[%s626 + $0x28] sm:$0xff]
    %v633 = vld [vmem:[%s626 + $0x30] sm:$0xff]
    %v634 = vld [vmem:[%s626 + $0x38] sm:$0xff]
    %v635 = vld [vmem:[%s626 + $0x40] sm:$0xff]
    %v636 = vld [vmem:[%s626 + $0x48] sm:$0xff]
    %v637 = vld [vmem:[%s626 + $0x50] sm:$0xff]
    %v638 = vld [vmem:[%s626 + $0x58] sm:$0xff]
    %v639 = vld [vmem:[%s626 + $0x60] sm:$0xff]
    %v640 = vld [vmem:[%s626 + $0x68] sm:$0xff]
    %v641 = vld [vmem:[%s626 + $0x70] sm:$0xff]
    %v642 = vld [vmem:[%s626 + $0x78] sm:$0xff]
    %vm645 = vcmask 1046528
    %v646 = vrot.slane %v594, 1
    %v647 = vrot.slane %v588, 1
    %v648 = vsel %vm645, %v646, %v647
    %v649 = vrot.slane %v595, 1
    %v650 = vsel %vm645, %v647, %v649
    %653 = vmatprep.subr.mxu0 0.0
    %654 = vmatpush1.msra.mxu0 %v627
    %655 = vmatprep.subr.mxu0 0.0
    %656 = vmatpush1.msra.mxu0 %v628
    %657 = vmatprep.subr.mxu0 0.0
    %658 = vmatpush1.msra.mxu0 %v629
    %659 = vmatprep.subr.mxu0 0.0
    %660 = vmatpush1.msra.mxu0 %v630
    %661 = vmatprep.subr.mxu0 0.0
    %662 = vmatpush1.msra.mxu0 %v631
    %663 = vmatprep.subr.mxu0 0.0
    %664 = vmatpush1.msra.mxu0 %v632
    %665 = vmatprep.subr.mxu0 0.0
    %666 = vmatpush1.msra.mxu0 %v633
    %667 = vmatprep.subr.mxu0 0.0
    %668 = vmatpush1.msra.mxu0 %v634
    %669 = vmatprep.subr.mxu0 0.0
    %670 = vmatpush1.msra.mxu0 %v635
    %671 = vmatprep.subr.mxu0 0.0
    %672 = vmatpush1.msra.mxu0 %v636
    %673 = vmatprep.subr.mxu0 0.0
    %674 = vmatpush1.msra.mxu0 %v637
    %675 = vmatprep.subr.mxu0 0.0
    %676 = vmatpush1.msra.mxu0 %v638
    %677 = vmatprep.subr.mxu0 0.0
    %678 = vmatpush1.msra.mxu0 %v639
    %679 = vmatprep.subr.mxu0 0.0
    %680 = vmatpush1.msra.mxu0 %v640
    %681 = vmatprep.subr.mxu0 0.0
    %682 = vmatpush1.msra.mxu0 %v641
    %683 = vmatprep.subr.mxu0 0.0
    %684 = vmatpush1.msra.mxu0 %v642
    %685 = vmatprep.subr.mxu0 0.0
    %686 = vmatpush1.msra.mxu0 0.0
    %687 = vmatprep.subr.mxu0 0.0
    %688 = vmatpush1.msra.mxu0 0.0
    %689 = vmatprep.subr.mxu0 0.0
    %690 = vmatpush1.msra.mxu0 0.0
    %691 = vmatprep.subr.mxu0 0.0
    %692 = vmatpush1.msra.mxu0 0.0
    %693 = vmatprep.subr.mxu0 0.0
    %694 = vmatpush1.msra.mxu0 0.0
    %695 = vmatprep.subr.mxu0 0.0
    %696 = vmatpush1.msra.mxu0 0.0
    %697 = vmatprep.subr.mxu0 0.0
    %698 = vmatpush1.msra.mxu0 0.0
    %699 = vmatprep.subr.mxu0 0.0
    %700 = vmatpush1.msra.mxu0 0.0
    %701 = vmatprep.subr.mxu0 0.0
    %702 = vmatpush1.msra.mxu0 0.0
    %703 = vmatprep.subr.mxu0 0.0
    %704 = vmatpush1.msra.mxu0 0.0
    %705 = vmatprep.subr.mxu0 0.0
    %706 = vmatpush1.msra.mxu0 0.0
    %707 = vmatprep.subr.mxu0 0.0
    %708 = vmatpush1.msra.mxu0 0.0
    %709 = vmatprep.subr.mxu0 0.0
    %710 = vmatpush1.msra.mxu0 0.0
    %711 = vmatprep.subr.mxu0 0.0
    %712 = vmatpush1.msra.mxu0 0.0
    %713 = vmatprep.subr.mxu0 0.0
    %714 = vmatpush1.msra.mxu0 0.0
    %715 = vmatprep.subr.mxu0 0.0
    %716 = vmatpush1.msra.mxu0 0.0
    %717 = vmatprep.mubr.f32.mxu0 0.0
    %718 = vmatmul.mubr.f32.gmra.mrb[0].mxu0 %v648
    %v719 = vpop.f32.mrb[0].mxu0
    %v720 = vadd.f32 0.0, %v719
    %v721 = vpop.f32.mrb[0].mxu0
    %722 = vmatprep.mubr.f32.mxu0 0.0
    %723 = vmatmul.mubr.f32.gmra.mrb[0].mxu0 %v650
    %v724 = vpop.f32.mrb[0].mxu0
    %v725 = vadd.f32 0.0, %v724
    %v726 = vpop.f32.mrb[0].mxu0
    %727 = vdwg.mxu0
    %728 = vmatprep.subr.mxu0 0.0
    %729 = vmatpush1.msra.mxu0 %v610
    %730 = vmatprep.subr.mxu0 0.0
    %731 = vmatpush1.msra.mxu0 %v611
    %732 = vmatprep.subr.mxu0 0.0
    %733 = vmatpush1.msra.mxu0 %v612
    %734 = vmatprep.subr.mxu0 0.0
    %735 = vmatpush1.msra.mxu0 %v613
    %736 = vmatprep.subr.mxu0 0.0
    %737 = vmatpush1.msra.mxu0 %v614
    %738 = vmatprep.subr.mxu0 0.0
    %739 = vmatpush1.msra.mxu0 %v615
    %740 = vmatprep.subr.mxu0 0.0
    %741 = vmatpush1.msra.mxu0 %v616
    %742 = vmatprep.subr.mxu0 0.0
    %743 = vmatpush1.msra.mxu0 %v617
    %744 = vmatprep.subr.mxu0 0.0
    %745 = vmatpush1.msra.mxu0 %v618
    %746 = vmatprep.subr.mxu0 0.0
    %747 = vmatpush1.msra.mxu0 %v619
    %748 = vmatprep.subr.mxu0 0.0
    %749 = vmatpush1.msra.mxu0 %v620
    %750 = vmatprep.subr.mxu0 0.0
    %751 = vmatpush1.msra.mxu0 %v621
    %752 = vmatprep.subr.mxu0 0.0
    %753 = vmatpush1.msra.mxu0 %v622
    %754 = vmatprep.subr.mxu0 0.0
    %755 = vmatpush1.msra.mxu0 %v623
    %756 = vmatprep.subr.mxu0 0.0
    %757 = vmatpush1.msra.mxu0 %v624
    %758 = vmatprep.subr.mxu0 0.0
    %759 = vmatpush1.msra.mxu0 %v625
    %760 = vmatprep.subr.mxu0 0.0
    %761 = vmatpush1.msra.mxu0 0.0
    %762 = vmatprep.subr.mxu0 0.0
    %763 = vmatpush1.msra.mxu0 0.0
    %764 = vmatprep.subr.mxu0 0.0
    %765 = vmatpush1.msra.mxu0 0.0
    %766 = vmatprep.subr.mxu0 0.0
    %767 = vmatpush1.msra.mxu0 0.0
    %768 = vmatprep.subr.mxu0 0.0
    %769 = vmatpush1.msra.mxu0 0.0
    %770 = vmatprep.subr.mxu0 0.0
    %771 = vmatpush1.msra.mxu0 0.0
    %772 = vmatprep.subr.mxu0 0.0
    %773 = vmatpush1.msra.mxu0 0.0
    %774 = vmatprep.subr.mxu0 0.0
    %775 = vmatpush1.msra.mxu0 0.0
    %776 = vmatprep.subr.mxu0 0.0
    %777 = vmatpush1.msra.mxu0 0.0
    %778 = vmatprep.subr.mxu0 0.0
    %779 = vmatpush1.msra.mxu0 0.0
    %780 = vmatprep.subr.mxu0 0.0
    %781 = vmatpush1.msra.mxu0 0.0
    %782 = vmatprep.subr.mxu0 0.0
    %783 = vmatpush1.msra.mxu0 0.0
    %784 = vmatprep.subr.mxu0 0.0
    %785 = vmatpush1.msra.mxu0 0.0
    %786 = vmatprep.subr.mxu0 0.0
    %787 = vmatpush1.msra.mxu0 0.0
    %788 = vmatprep.subr.mxu0 0.0
    %789 = vmatpush1.msra.mxu0 0.0
    %790 = vmatprep.subr.mxu0 0.0
    %791 = vmatpush1.msra.mxu0 0.0
    %792 = vmatprep.mubr.f32.mxu0 0.0
    %793 = vmatmul.mubr.f32.gmra.mrb[0].mxu0 %v594
    %v794 = vpop.f32.mrb[0].mxu0
    %v795 = vadd.f32 %v720, %v794
    %v796 = vpop.f32.mrb[0].mxu0
    %797 = vmatprep.mubr.f32.mxu0 0.0
    %798 = vmatmul.mubr.f32.gmra.mrb[0].mxu0 %v588
    %v799 = vpop.f32.mrb[0].mxu0
    %v800 = vadd.f32 %v725, %v799
    %v801 = vpop.f32.mrb[0].mxu0
    %802 = vdwg.mxu0
    %v805 = vrot.slane %v608, 1
    %v806 = vrot.slane %v602, 1
    %v807 = vsel %vm645, %v805, %v806
    %v808 = vrot.slane %v609, 1
    %v809 = vsel %vm645, %v806, %v808
    %812 = vmatprep.subr.mxu0 0.0
    %813 = vmatpush1.msra.mxu0 %v627
    %814 = vmatprep.subr.mxu0 0.0
    %815 = vmatpush1.msra.mxu0 %v628
    %816 = vmatprep.subr.mxu0 0.0
    %817 = vmatpush1.msra.mxu0 %v629
    %818 = vmatprep.subr.mxu0 0.0
    %819 = vmatpush1.msra.mxu0 %v630
    %820 = vmatprep.subr.mxu0 0.0
    %821 = vmatpush1.msra.mxu0 %v631
    %822 = vmatprep.subr.mxu0 0.0
    %823 = vmatpush1.msra.mxu0 %v632
    %824 = vmatprep.subr.mxu0 0.0
    %825 = vmatpush1.msra.mxu0 %v633
    %826 = vmatprep.subr.mxu0 0.0
    %827 = vmatpush1.msra.mxu0 %v634
    %828 = vmatprep.subr.mxu0 0.0
    %829 = vmatpush1.msra.mxu0 %v635
    %830 = vmatprep.subr.mxu0 0.0
    %831 = vmatpush1.msra.mxu0 %v636
    %832 = vmatprep.subr.mxu0 0.0
    %833 = vmatpush1.msra.mxu0 %v637
    %834 = vmatprep.subr.mxu0 0.0
    %835 = vmatpush1.msra.mxu0 %v638
    %836 = vmatprep.subr.mxu0 0.0
    %837 = vmatpush1.msra.mxu0 %v639
    %838 = vmatprep.subr.mxu0 0.0
    %839 = vmatpush1.msra.mxu0 %v640
    %840 = vmatprep.subr.mxu0 0.0
    %841 = vmatpush1.msra.mxu0 %v641
    %842 = vmatprep.subr.mxu0 0.0
    %843 = vmatpush1.msra.mxu0 %v642
    %844 = vmatprep.subr.mxu0 0.0
    %845 = vmatpush1.msra.mxu0 0.0
    %846 = vmatprep.subr.mxu0 0.0
    %847 = vmatpush1.msra.mxu0 0.0
    %848 = vmatprep.subr.mxu0 0.0
    %849 = vmatpush1.msra.mxu0 0.0
    %850 = vmatprep.subr.mxu0 0.0
    %851 = vmatpush1.msra.mxu0 0.0
    %852 = vmatprep.subr.mxu0 0.0
    %853 = vmatpush1.msra.mxu0 0.0
    %854 = vmatprep.subr.mxu0 0.0
    %855 = vmatpush1.msra.mxu0 0.0
    %856 = vmatprep.subr.mxu0 0.0
    %857 = vmatpush1.msra.mxu0 0.0
    %858 = vmatprep.subr.mxu0 0.0
    %859 = vmatpush1.msra.mxu0 0.0
    %860 = vmatprep.subr.mxu0 0.0
    %861 = vmatpush1.msra.mxu0 0.0
    %862 = vmatprep.subr.mxu0 0.0
    %863 = vmatpush1.msra.mxu0 0.0
    %864 = vmatprep.subr.mxu0 0.0
    %865 = vmatpush1.msra.mxu0 0.0
    %866 = vmatprep.subr.mxu0 0.0
    %867 = vmatpush1.msra.mxu0 0.0
    %868 = vmatprep.subr.mxu0 0.0
    %869 = vmatpush1.msra.mxu0 0.0
    %870 = vmatprep.subr.mxu0 0.0
    %871 = vmatpush1.msra.mxu0 0.0
    %872 = vmatprep.subr.mxu0 0.0
    %873 = vmatpush1.msra.mxu0 0.0
    %874 = vmatprep.subr.mxu0 0.0
    %875 = vmatpush1.msra.mxu0 0.0
    %876 = vmatprep.mubr.f32.mxu0 0.0
    %877 = vmatmul.mubr.f32.gmra.mrb[0].mxu0 %v807
    %v878 = vpop.f32.mrb[0].mxu0
    %v879 = vadd.f32 0.0, %v878
    %v880 = vpop.f32.mrb[0].mxu0
    %881 = vmatprep.mubr.f32.mxu0 0.0
    %882 = vmatmul.mubr.f32.gmra.mrb[0].mxu0 %v809
    %v883 = vpop.f32.mrb[0].mxu0
    %v884 = vadd.f32 0.0, %v883
    %v885 = vpop.f32.mrb[0].mxu0
    %886 = vdwg.mxu0
    %887 = vmatprep.subr.mxu0 0.0
    %888 = vmatpush1.msra.mxu0 %v610
    %889 = vmatprep.subr.mxu0 0.0
    %890 = vmatpush1.msra.mxu0 %v611
    %891 = vmatprep.subr.mxu0 0.0
    %892 = vmatpush1.msra.mxu0 %v612
    %893 = vmatprep.subr.mxu0 0.0
    %894 = vmatpush1.msra.mxu0 %v613
    %895 = vmatprep.subr.mxu0 0.0
    %896 = vmatpush1.msra.mxu0 %v614
    %897 = vmatprep.subr.mxu0 0.0
    %898 = vmatpush1.msra.mxu0 %v615
    %899 = vmatprep.subr.mxu0 0.0
    %900 = vmatpush1.msra.mxu0 %v616
    %901 = vmatprep.subr.mxu0 0.0
    %902 = vmatpush1.msra.mxu0 %v617
    %903 = vmatprep.subr.mxu0 0.0
    %904 = vmatpush1.msra.mxu0 %v618
    %905 = vmatprep.subr.mxu0 0.0
    %906 = vmatpush1.msra.mxu0 %v619
    %907 = vmatprep.subr.mxu0 0.0
    %908 = vmatpush1.msra.mxu0 %v620
    %909 = vmatprep.subr.mxu0 0.0
    %910 = vmatpush1.msra.mxu0 %v621
    %911 = vmatprep.subr.mxu0 0.0
    %912 = vmatpush1.msra.mxu0 %v622
    %913 = vmatprep.subr.mxu0 0.0
    %914 = vmatpush1.msra.mxu0 %v623
    %915 = vmatprep.subr.mxu0 0.0
    %916 = vmatpush1.msra.mxu0 %v624
    %917 = vmatprep.subr.mxu0 0.0
    %918 = vmatpush1.msra.mxu0 %v625
    %919 = vmatprep.subr.mxu0 0.0
    %920 = vmatpush1.msra.mxu0 0.0
    %921 = vmatprep.subr.mxu0 0.0
    %922 = vmatpush1.msra.mxu0 0.0
    %923 = vmatprep.subr.mxu0 0.0
    %924 = vmatpush1.msra.mxu0 0.0
    %925 = vmatprep.subr.mxu0 0.0
    %926 = vmatpush1.msra.mxu0 0.0
    %927 = vmatprep.subr.mxu0 0.0
    %928 = vmatpush1.msra.mxu0 0.0
    %929 = vmatprep.subr.mxu0 0.0
    %930 = vmatpush1.msra.mxu0 0.0
    %931 = vmatprep.subr.mxu0 0.0
    %932 = vmatpush1.msra.mxu0 0.0
    %933 = vmatprep.subr.mxu0 0.0
    %934 = vmatpush1.msra.mxu0 0.0
    %935 = vmatprep.subr.mxu0 0.0
    %936 = vmatpush1.msra.mxu0 0.0
    %937 = vmatprep.subr.mxu0 0.0
    %938 = vmatpush1.msra.mxu0 0.0
    %939 = vmatprep.subr.mxu0 0.0
    %940 = vmatpush1.msra.mxu0 0.0
    %941 = vmatprep.subr.mxu0 0.0
    %942 = vmatpush1.msra.mxu0 0.0
    %943 = vmatprep.subr.mxu0 0.0
    %944 = vmatpush1.msra.mxu0 0.0
    %945 = vmatprep.subr.mxu0 0.0
    %946 = vmatpush1.msra.mxu0 0.0
    %947 = vmatprep.subr.mxu0 0.0
    %948 = vmatpush1.msra.mxu0 0.0
    %949 = vmatprep.subr.mxu0 0.0
    %950 = vmatpush1.msra.mxu0 0.0
    %951 = vmatprep.mubr.f32.mxu0 0.0
    %952 = vmatmul.mubr.f32.gmra.mrb[0].mxu0 %v608
    %v953 = vpop.f32.mrb[0].mxu0
    %v954 = vadd.f32 %v879, %v953
    %v955 = vpop.f32.mrb[0].mxu0
    %956 = vmatprep.mubr.f32.mxu0 0.0
    %957 = vmatmul.mubr.f32.gmra.mrb[0].mxu0 %v602
    %v958 = vpop.f32.mrb[0].mxu0
    %v959 = vadd.f32 %v884, %v958
    %v960 = vpop.f32.mrb[0].mxu0
    %961 = vdwg.mxu0
    %s962 = scalar_lea.vmem [#allocation5], 256
    %v963 = vld [vmem:[%s962] sm:$0xff]
    %v964 = vld [vmem:[%s962 + $0x8] sm:$0xff]
    %v965 = vld [vmem:[%s962 + $0x10] sm:$0xff]
    %v966 = vld [vmem:[%s962 + $0x18] sm:$0xff]
    %v967 = vld [vmem:[%s962 + $0x20] sm:$0xff]
    %v968 = vld [vmem:[%s962 + $0x28] sm:$0xff]
    %v969 = vld [vmem:[%s962 + $0x30] sm:$0xff]
    %v970 = vld [vmem:[%s962 + $0x38] sm:$0xff]
    %v971 = vld [vmem:[%s962 + $0x40] sm:$0xff]
    %v972 = vld [vmem:[%s962 + $0x48] sm:$0xff]
    %v973 = vld [vmem:[%s962 + $0x50] sm:$0xff]
    %v974 = vld [vmem:[%s962 + $0x58] sm:$0xff]
    %v975 = vld [vmem:[%s962 + $0x60] sm:$0xff]
    %v976 = vld [vmem:[%s962 + $0x68] sm:$0xff]
    %v977 = vld [vmem:[%s962 + $0x70] sm:$0xff]
    %v978 = vld [vmem:[%s962 + $0x78] sm:$0xff]
    %vm979 = vcmask 1045504
    %v980 = vrot.slane %v594, 2
    %v981 = vrot.slane %v588, 2
    %v982 = vsel %vm979, %v980, %v981
    %v983 = vrot.slane %v595, 2
    %v984 = vsel %vm979, %v981, %v983
    %987 = vmatprep.subr.mxu0 0.0
    %988 = vmatpush1.msra.mxu0 %v963
    %989 = vmatprep.subr.mxu0 0.0
    %990 = vmatpush1.msra.mxu0 %v964
    %991 = vmatprep.subr.mxu0 0.0
    %992 = vmatpush1.msra.mxu0 %v965
    %993 = vmatprep.subr.mxu0 0.0
    %994 = vmatpush1.msra.mxu0 %v966
    %995 = vmatprep.subr.mxu0 0.0
    %996 = vmatpush1.msra.mxu0 %v967
    %997 = vmatprep.subr.mxu0 0.0
    %998 = vmatpush1.msra.mxu0 %v968
    %999 = vmatprep.subr.mxu0 0.0
    %1000 = vmatpush1.msra.mxu0 %v969
    %1001 = vmatprep.subr.mxu0 0.0
    %1002 = vmatpush1.msra.mxu0 %v970
    %1003 = vmatprep.subr.mxu0 0.0
    %1004 = vmatpush1.msra.mxu0 %v971
    %1005 = vmatprep.subr.mxu0 0.0
    %1006 = vmatpush1.msra.mxu0 %v972
    %1007 = vmatprep.subr.mxu0 0.0
    %1008 = vmatpush1.msra.mxu0 %v973
    %1009 = vmatprep.subr.mxu0 0.0
    %1010 = vmatpush1.msra.mxu0 %v974
    %1011 = vmatprep.subr.mxu0 0.0
    %1012 = vmatpush1.msra.mxu0 %v975
    %1013 = vmatprep.subr.mxu0 0.0
    %1014 = vmatpush1.msra.mxu0 %v976
    %1015 = vmatprep.subr.mxu0 0.0
    %1016 = vmatpush1.msra.mxu0 %v977
    %1017 = vmatprep.subr.mxu0 0.0
    %1018 = vmatpush1.msra.mxu0 %v978
    %1019 = vmatprep.subr.mxu0 0.0
    %1020 = vmatpush1.msra.mxu0 0.0
    %1021 = vmatprep.subr.mxu0 0.0
    %1022 = vmatpush1.msra.mxu0 0.0
    %1023 = vmatprep.subr.mxu0 0.0
    %1024 = vmatpush1.msra.mxu0 0.0
    %1025 = vmatprep.subr.mxu0 0.0
    %1026 = vmatpush1.msra.mxu0 0.0
    %1027 = vmatprep.subr.mxu0 0.0
    %1028 = vmatpush1.msra.mxu0 0.0
    %1029 = vmatprep.subr.mxu0 0.0
    %1030 = vmatpush1.msra.mxu0 0.0
    %1031 = vmatprep.subr.mxu0 0.0
    %1032 = vmatpush1.msra.mxu0 0.0
    %1033 = vmatprep.subr.mxu0 0.0
    %1034 = vmatpush1.msra.mxu0 0.0
    %1035 = vmatprep.subr.mxu0 0.0
    %1036 = vmatpush1.msra.mxu0 0.0
    %1037 = vmatprep.subr.mxu0 0.0
    %1038 = vmatpush1.msra.mxu0 0.0
    %1039 = vmatprep.subr.mxu0 0.0
    %1040 = vmatpush1.msra.mxu0 0.0
    %1041 = vmatprep.subr.mxu0 0.0
    %1042 = vmatpush1.msra.mxu0 0.0
    %1043 = vmatprep.subr.mxu0 0.0
    %1044 = vmatpush1.msra.mxu0 0.0
    %1045 = vmatprep.subr.mxu0 0.0
    %1046 = vmatpush1.msra.mxu0 0.0
    %1047 = vmatprep.subr.mxu0 0.0
    %1048 = vmatpush1.msra.mxu0 0.0
    %1049 = vmatprep.subr.mxu0 0.0
    %1050 = vmatpush1.msra.mxu0 0.0
    %1051 = vmatprep.mubr.f32.mxu0 0.0
    %1052 = vmatmul.mubr.f32.gmra.mrb[0].mxu0 %v982
    %v1053 = vpop.f32.mrb[0].mxu0
    %v1054 = vadd.f32 0.0, %v1053
    %v1055 = vpop.f32.mrb[0].mxu0
    %1056 = vmatprep.mubr.f32.mxu0 0.0
    %1057 = vmatmul.mubr.f32.gmra.mrb[0].mxu0 %v984
    %v1058 = vpop.f32.mrb[0].mxu0
    %v1059 = vadd.f32 0.0, %v1058
    %v1060 = vpop.f32.mrb[0].mxu0
    %1061 = vdwg.mxu0
    %v1062 = vadd.f32 %v795, %v1054
    %v1063 = vadd.f32 %v800, %v1059
    %v1064 = vrot.slane %v608, 2
    %v1065 = vrot.slane %v602, 2
    %v1066 = vsel %vm979, %v1064, %v1065
    %v1067 = vrot.slane %v609, 2
    %v1068 = vsel %vm979, %v1065, %v1067
    %1071 = vmatprep.subr.mxu0 0.0
    %1072 = vmatpush1.msra.mxu0 %v963
    %1073 = vmatprep.subr.mxu0 0.0
    %1074 = vmatpush1.msra.mxu0 %v964
    %1075 = vmatprep.subr.mxu0 0.0
    %1076 = vmatpush1.msra.mxu0 %v965
    %1077 = vmatprep.subr.mxu0 0.0
    %1078 = vmatpush1.msra.mxu0 %v966
    %1079 = vmatprep.subr.mxu0 0.0
    %1080 = vmatpush1.msra.mxu0 %v967
    %1081 = vmatprep.subr.mxu0 0.0
    %1082 = vmatpush1.msra.mxu0 %v968
    %1083 = vmatprep.subr.mxu0 0.0
    %1084 = vmatpush1.msra.mxu0 %v969
    %1085 = vmatprep.subr.mxu0 0.0
    %1086 = vmatpush1.msra.mxu0 %v970
    %1087 = vmatprep.subr.mxu0 0.0
    %1088 = vmatpush1.msra.mxu0 %v971
    %1089 = vmatprep.subr.mxu0 0.0
    %1090 = vmatpush1.msra.mxu0 %v972
    %1091 = vmatprep.subr.mxu0 0.0
    %1092 = vmatpush1.msra.mxu0 %v973
    %1093 = vmatprep.subr.mxu0 0.0
    %1094 = vmatpush1.msra.mxu0 %v974
    %1095 = vmatprep.subr.mxu0 0.0
    %1096 = vmatpush1.msra.mxu0 %v975
    %1097 = vmatprep.subr.mxu0 0.0
    %1098 = vmatpush1.msra.mxu0 %v976
    %1099 = vmatprep.subr.mxu0 0.0
    %1100 = vmatpush1.msra.mxu0 %v977
    %1101 = vmatprep.subr.mxu0 0.0
    %1102 = vmatpush1.msra.mxu0 %v978
    %1103 = vmatprep.subr.mxu0 0.0
    %1104 = vmatpush1.msra.mxu0 0.0
    %1105 = vmatprep.subr.mxu0 0.0
    %1106 = vmatpush1.msra.mxu0 0.0
    %1107 = vmatprep.subr.mxu0 0.0
    %1108 = vmatpush1.msra.mxu0 0.0
    %1109 = vmatprep.subr.mxu0 0.0
    %1110 = vmatpush1.msra.mxu0 0.0
    %1111 = vmatprep.subr.mxu0 0.0
    %1112 = vmatpush1.msra.mxu0 0.0
    %1113 = vmatprep.subr.mxu0 0.0
    %1114 = vmatpush1.msra.mxu0 0.0
    %1115 = vmatprep.subr.mxu0 0.0
    %1116 = vmatpush1.msra.mxu0 0.0
    %1117 = vmatprep.subr.mxu0 0.0
    %1118 = vmatpush1.msra.mxu0 0.0
    %1119 = vmatprep.subr.mxu0 0.0
    %1120 = vmatpush1.msra.mxu0 0.0
    %1121 = vmatprep.subr.mxu0 0.0
    %1122 = vmatpush1.msra.mxu0 0.0
    %1123 = vmatprep.subr.mxu0 0.0
    %1124 = vmatpush1.msra.mxu0 0.0
    %1125 = vmatprep.subr.mxu0 0.0
    %1126 = vmatpush1.msra.mxu0 0.0
    %1127 = vmatprep.subr.mxu0 0.0
    %1128 = vmatpush1.msra.mxu0 0.0
    %1129 = vmatprep.subr.mxu0 0.0
    %1130 = vmatpush1.msra.mxu0 0.0
    %1131 = vmatprep.subr.mxu0 0.0
    %1132 = vmatpush1.msra.mxu0 0.0
    %1133 = vmatprep.subr.mxu0 0.0
    %1134 = vmatpush1.msra.mxu0 0.0
    %1135 = vmatprep.mubr.f32.mxu0 0.0
    %1136 = vmatmul.mubr.f32.gmra.mrb[0].mxu0 %v1066
    %v1137 = vpop.f32.mrb[0].mxu0
    %v1138 = vadd.f32 0.0, %v1137
    %v1139 = vpop.f32.mrb[0].mxu0
    %1140 = vmatprep.mubr.f32.mxu0 0.0
    %1141 = vmatmul.mubr.f32.gmra.mrb[0].mxu0 %v1068
    %v1142 = vpop.f32.mrb[0].mxu0
    %v1143 = vadd.f32 0.0, %v1142
    %v1144 = vpop.f32.mrb[0].mxu0
    %1145 = vdwg.mxu0
    %v1146 = vadd.f32 %v954, %v1138
    %v1147 = vadd.f32 %v959, %v1143
    %v1148 = vld [vmem:[%s4] sm:$0x1]
    %v1149 = vadd.f32 %v87, %v1062
    %v1150 = vadd.f32 %v88, %v1063
    %v1152 = vlaneseq
    %v1153 = vshrl.u32 %v1152, 7
    %v1154 = vsub.s32 0, %v1153
    %v1155 = vrot.slane %v1148, %v1154
    %v1157 = vadd.f32 %v1149, %v1155
    %v1158 = vadd.f32 %v1150, %v1155
    %1159 = vst [vmem:[#allocation7] sm:$0xff] %v1157
    %1160 = vst [vmem:[#allocation7 + $0x8] sm:$0xff] %v1158
    %v1161 = vld [vmem:[%s67 + $0x1] sm:$0xff]
    %v1162 = vld [vmem:[%s67 + $0x9] sm:$0xff]
    %v1163 = vadd.f32 %v1161, %v1146
    %v1164 = vadd.f32 %v1162, %v1147
    %v1165 = vadd.f32 %v1163, %v1155
    %v1166 = vadd.f32 %v1164, %v1155
    %s1167 = scalar_lea.vmem [#allocation7], 16
    %1168 = vst [vmem:[%s1167] sm:$0xff] %v1165
    %1169 = vst [vmem:[%s1167 + $0x8] sm:$0xff] %v1166
    // Predicated region
    $region30: #{tpu_custom_call.1} parent=1 // pred_check
      _
    $region31: #{tpu_custom_call.1} parent=1 // pred_check_branch
      %1171 = sbr.rel (0) target = $region33
    $region32: #{tpu_custom_call.1} parent=1 // pred_region
      %s1173 = ssub.s32 512, 512
      %1174 = vsyncadd [#allocation4], %s1173
      %s1175 = sshll.u32 [#allocation7], 4
      %s1176 = int_to_ptr.vmem [resolvable:$true] %s1175
      %1181 = dma.vmem_to_hbm [thread:$0]  %s1176, 512, %s5, [#allocation4], 128, 128, 8
    $region33: #{tpu_custom_call.1} parent=1 // pred_fallthru
      _
    // Predicated region
    $region34: #{tpu_custom_call.1} parent=1 // pred_check
      _
    $region35: #{tpu_custom_call.1} parent=1 // pred_check_branch
      %1183 = sbr.rel (0) target = $region37
    $region36: #{tpu_custom_call.1} parent=1 // pred_region
      %1184 = dma.done [#allocation4], 512
    $region37: #{tpu_custom_call.1} parent=1 // pred_fallthru
      _
    %1185 = vsyncpa [#allocation3], 1
    %1186 = vsyncpa [#allocation6], 1
    %1187 = vsyncpa [#allocation4], 1

</llo_original>
